<compile_context>
chip_gen: v7x
topology: tpu7x:2x2x1
jax: 0.10.0
libtpu: 0.0.40
codegen_flags: <defaults>
</compile_context>

<pallas_src>
import functools

import jax
import jax.numpy as jnp
import numpy as np
from jax.experimental import pallas as pl
from jax.experimental.pallas import tpu as pltpu

_IGNORE = -100
_SMOOTH = 1e-5


def _dice_partials_kernel(x_ref, t_ref, o_ref, acc_ref, *, n_classes, n_inner,
                          tile_s, s_total, use_softmax, mask_tail):
    s = pl.program_id(1)

    @pl.when(s == 0)
    def _init():
        acc_ref[...] = jnp.zeros_like(acc_ref)

    # Element-wise math kept in f32: portable to v5e (no bf16 VPU/EUP) and
    # holds the 1e-5 tolerance.  The kernel is HBM-bound at these shapes, so
    # a bf16 VALU path (v6e/v7x only) would not move wall-clock.
    x = x_ref[...].astype(jnp.float32)                        # (B, C, TS)
    if use_softmax:
        m = jnp.max(x, axis=1, keepdims=True)                 # channel softmax
        e = jnp.exp(x - m)
        denom = jnp.sum(e, axis=1, keepdims=True)
        r = pl.reciprocal(denom, approx=True)                 # EUP slot
        r = r * (2.0 - denom * r)                             # Newton step (~1e-7 rel)
        x = e * r

    t = t_ref[...].astype(jnp.int32)                          # (B, TS); int8 in HBM
    valid = t != _IGNORE
    if mask_tail:
        p = pl.program_id(0)
        col = ((p * n_inner + s) * tile_s
               + jax.lax.broadcasted_iota(jnp.int32, t.shape, 1))
        valid = jnp.logical_and(valid, col < s_total)         # in-bounds lanes only

    # Broadcasted one-hot: (B, 1, TS) == (1, C, 1) -> (B, C, TS)
    cls = jax.lax.broadcasted_iota(jnp.int32, (1, n_classes, 1), 1)
    onehot = jnp.logical_and(t[:, None, :] == cls, valid[:, None, :])

    # Select BEFORE multiplying (NaN-safe for tail garbage; no bool->f32
    # converts, no validf broadcast-multiply).  Reduce only over batch here
    # (cheap VALU adds); the cross-lane reduction runs once per chunk.
    xm = jnp.where(valid[:, None, :], x, 0.0)
    part_i = jnp.sum(jnp.where(onehot, x, 0.0), axis=0)       # (C, TS)
    part_y = jnp.sum(jnp.where(onehot, 1.0, 0.0), axis=0)     # (C, TS)
    part_z = jnp.sum(xm * xm, axis=0)                         # (C, TS)

    C = n_classes
    acc_ref[0:C, :] += part_i
    acc_ref[C:2 * C, :] += part_y
    acc_ref[2 * C:, :] += part_z

    @pl.when(s == n_inner - 1)
    def _finalize():
        # One XLU lane-reduction per chunk -> (1, 3*C, 1) partial sums.
        o_ref[...] = jnp.sum(acc_ref[...], axis=-1, keepdims=True)[None]


def _round_up(x, m):
    return (x + m - 1) // m * m


def _pick_tile(B, C, S, x_itemsize, max_tile_s, budget):
    # Per-lane VMEM of one grid step: double-buffered input tiles (x + int8
    # target), ~5 live (B, C, tile) f32 temporaries (f32 cast / exp / onehot /
    # masked probs / product), and the merged (3C, tile) f32 accumulator.
    per_lane = (2 * (B * C * x_itemsize + B * 1)
                + 5 * B * C * 4
                + _round_up(3 * C, 8) * 4)
    if S < 128:
        return S, per_lane                       # single full-extent block
    cap = (S // 128) * 128                       # keep block <= array extent
    if max_tile_s is not None:
        cap = min(cap, max(128, (max_tile_s // 128) * 128))
    tile = (budget // per_lane) // 128 * 128
    tile = max(128, min(int(tile), int(cap)))
    return tile, per_lane


def dice_loss(inputs, target, n_classes, weight=None, softmax=False, *,
              max_tile_s=None):
    """Pallas equivalent of DiceLoss(n_classes)(inputs, target, weight, softmax)."""
    B, C, H, W = inputs.shape
    assert C == n_classes, "channel dim must equal n_classes"
    assert n_classes <= 127, "int8 target path requires n_classes <= 127"
    S = H * W
    x = inputs.reshape(B, C, S)                        # keep caller dtype (f32 / bf16)
    t = target.reshape(B, S).astype(jnp.int8)          # class ids and -100 fit in int8

    try:
        vmem_cap = int(pltpu.get_tpu_info().vmem_capacity_bytes)
    except Exception:
        vmem_cap = 64 * 2**20                          # v7x per-core size (safe floor)
    budget = min(24 * 2**20, vmem_cap // 3)            # working-set budget per step

    tile_s, per_lane = _pick_tile(B, C, S, jnp.dtype(x.dtype).itemsize,
                                  max_tile_s, budget)

    n_tiles = -(-S // tile_s)
    num_chunks = 2 if n_tiles >= 2 else 1              # 2 TCs on v7x; harmless on v5e/v6e
    n_inner = -(-n_tiles // num_chunks)
    mask_tail = (num_chunks * n_inner * tile_s) != S
    last_blk = n_tiles - 1                             # clamp keeps every DMA in-bounds

    kernel = functools.partial(
        _dice_partials_kernel, n_classes=n_classes, n_inner=n_inner,
        tile_s=tile_s, s_total=S, use_softmax=bool(softmax), mask_tail=mask_tail)

    vmem_limit = int(min(max(per_lane * tile_s + 6 * 2**20, 16 * 2**20),
                         vmem_cap // 2))

    x_map = lambda p, s: (0, 0, jnp.minimum(p * n_inner + s, last_blk))
    t_map = lambda p, s: (0, jnp.minimum(p * n_inner + s, last_blk))

    partials = pl.pallas_call(
        kernel,
        out_shape=jax.ShapeDtypeStruct((num_chunks, 3 * C, 1), jnp.float32),
        grid_spec=pltpu.PrefetchScalarGridSpec(
            num_scalar_prefetch=0,
            grid=(num_chunks, n_inner),
            in_specs=[
                pl.BlockSpec((B, C, tile_s), x_map),
                pl.BlockSpec((B, tile_s), t_map),
            ],
            out_specs=pl.BlockSpec((1, 3 * C, 1), lambda p, s: (p, 0, 0)),
            scratch_shapes=[
                pltpu.VMEM((3 * C, tile_s), jnp.float32),   # merged accumulator
            ],
        ),
        compiler_params=pltpu.CompilerParams(
            dimension_semantics=("parallel", "arbitrary"),
            vmem_limit_bytes=vmem_limit,
        ),
    )(x, t)

    # Tiny epilogue in plain JAX: combine per-chunk partials, dice formula,
    # weighted sum.  weight is a runtime value -> no kernel recompiles.
    sums = jnp.sum(partials[:, :, 0], axis=0)          # (3*C,)
    intersect = sums[:C]
    y_sum = sums[C:2 * C]
    z_sum = sums[2 * C:]
    dice = 1.0 - (2.0 * intersect + _SMOOTH) / (z_sum + y_sum + _SMOOTH)
    w = (jnp.ones((C,), jnp.float32) if weight is None
         else jnp.asarray(weight, jnp.float32))
    return jnp.sum(dice * w) / n_classes


def _dice_ref(inputs, target, n_classes, weight=None, softmax=False):
    """Pure-JAX reference mirroring the PyTorch module exactly."""
    x = jax.nn.softmax(inputs, axis=1) if softmax else inputs
    x = x.astype(jnp.float32)
    if weight is None:
        weight = [1.0] * n_classes
    valid = target != _IGNORE
    validf = valid.astype(jnp.float32)
    loss = 0.0
    for i in range(n_classes):
        score = x[:, i]
        onehot = (valid & (target == i)).astype(jnp.float32)
        intersect = jnp.sum(score * onehot)
        y_sum = jnp.sum(onehot)
        z_sum = jnp.sum(score * score * validf)
        dice = 1.0 - (2.0 * intersect + _SMOOTH) / (z_sum + y_sum + _SMOOTH)
        loss = loss + dice * weight[i]
    return loss / n_classes


if __name__ == "__main__":
    key = jax.random.PRNGKey(0)
    k1, k2, k3, k4 = jax.random.split(key, 4)

    B, C, H, W = 2, 4, 16, 16
    logits = jax.random.normal(k1, (B, C, H, W), dtype=jnp.float32)
    target = jax.random.randint(k2, (B, H, W), 0, C, dtype=jnp.int32)
    # Mark a few pixels with ignore_index = -100 to exercise the mask path.
    target = target.at[0, 0, :5].set(-100)
    target = target.at[1, 3, 2:7].set(-100)

    # 1) softmax path, single chunk / single tile
    out = jax.block_until_ready(dice_loss(logits, target, n_classes=C, softmax=True))
    ref = _dice_ref(logits, target, C, softmax=True)
    np.testing.assert_allclose(np.asarray(out), np.asarray(ref), rtol=1e-5, atol=1e-5)

    # 2) pre-softmaxed probabilities, non-default weights, 2-chunk parallel grid
    probs = jax.nn.softmax(logits, axis=1)
    wts = [0.5, 1.0, 2.0, 1.5]
    out2 = jax.block_until_ready(
        dice_loss(probs, target, n_classes=C, weight=wts, max_tile_s=128))
    ref2 = _dice_ref(probs, target, C, weight=wts)
    np.testing.assert_allclose(np.asarray(out2), np.asarray(ref2), rtol=1e-5, atol=1e-5)

    # 3) spatial size not a multiple of the tile (tail masking + odd tile count
    #    -> one clamped, fully-masked block on the second chunk)
    H2, W2 = 15, 20   # S = 300
    logits2 = jax.random.normal(k3, (B, C, H2, W2), dtype=jnp.float32)
    target2 = jax.random.randint(k4, (B, H2, W2), 0, C, dtype=jnp.int32)
    target2 = target2.at[0, 1, :3].set(-100)
    out3 = jax.block_until_ready(
        dice_loss(logits2, target2, n_classes=C, softmax=True, max_tile_s=128))
    ref3 = _dice_ref(logits2, target2, C, softmax=True)
    np.testing.assert_allclose(np.asarray(out3), np.asarray(ref3), rtol=1e-5, atol=1e-5)

    # 4) bf16 logits (halves HBM traffic; math is f32 inside the kernel)
    logits_bf16 = logits.astype(jnp.bfloat16)
    out4 = jax.block_until_ready(dice_loss(logits_bf16, target, n_classes=C, softmax=True))
    ref4 = _dice_ref(logits_bf16.astype(jnp.float32), target, C, softmax=True)
    np.testing.assert_allclose(np.asarray(out4), np.asarray(ref4), rtol=1e-4, atol=1e-4)

    print("KERNEL_OK")
</pallas_src>

<mosaic_0001>
module attributes {stable_mosaic.version = 11 : i64} {
  func.func @_dice_partials_kernel(%arg0: i32, %arg1: i32, %arg2: memref<2x4x256xf32, #tpu.memory_space<vmem>>, %arg3: memref<2x256xi8, #tpu.memory_space<vmem>>, %arg4: memref<1x12x1xf32, #tpu.memory_space<vmem>>, %arg5: memref<12x256xf32, #tpu.memory_space<vmem>>) attributes {dimension_semantics = [#tpu.dimension_semantics<parallel>, #tpu.dimension_semantics<arbitrary>], iteration_bounds = array<i64: 1, 1>, scalar_prefetch = 0 : i64, scratch_operands = 1 : i64, tpu.core_type = #tpu.core_type<tc>, window_params = [{transform_indices = @transform_0, window_bounds = array<i64: 2, 4, 256>}, {transform_indices = @transform_1, window_bounds = array<i64: 2, 256>}, {transform_indices = @transform_2, window_bounds = array<i64: 1, 12, 1>}]} {
    %c0_i32 = arith.constant 0 : i32
    %0 = arith.cmpi eq, %arg1, %c0_i32 : i32
    %1 = arith.extui %0 : i1 to i32
    %c0_i32_0 = arith.constant 0 : i32
    %2 = arith.cmpi ne, %1, %c0_i32_0 : i32
    scf.if %2 {
      %cst_26 = arith.constant 0.000000e+00 : f32
      %56 = vector.broadcast %cst_26 : f32 to vector<12x256xf32>
      %c0_27 = arith.constant 0 : index
      %c0_28 = arith.constant 0 : index
      %57 = vector.load %arg5[%c0_27, %c0_28] : memref<12x256xf32, #tpu.memory_space<vmem>>, vector<12x256xf32>
      tpu.vector_store %arg5[%c0_27, %c0_28], %56 {strides = array<i32>} : memref<12x256xf32, #tpu.memory_space<vmem>>, vector<12x256xf32>,
    } else {
    }
    %c0 = arith.constant 0 : index
    %c0_1 = arith.constant 0 : index
    %c0_2 = arith.constant 0 : index
    %3 = vector.load %arg2[%c0, %c0_1, %c0_2] : memref<2x4x256xf32, #tpu.memory_space<vmem>>, vector<2x4x256xf32>
    %cst = arith.constant dense<0xFF800000> : vector<2x256xf32>
    %4 = vector.multi_reduction <maximumf>, %3, %cst [1] : vector<2x4x256xf32> to vector<2x256xf32>
    %5 = vector.shape_cast %4 : vector<2x256xf32> to vector<2x1x256xf32>
    %6 = vector.broadcast %5 : vector<2x1x256xf32> to vector<2x4x256xf32>
    %7 = arith.subf %3, %6 : vector<2x4x256xf32>
    %8 = math.exp %7 : vector<2x4x256xf32>
    %cst_3 = arith.constant dense<0.000000e+00> : vector<2x256xf32>
    %9 = vector.multi_reduction <add>, %8, %cst_3 [1] : vector<2x4x256xf32> to vector<2x256xf32>
    %10 = vector.shape_cast %9 : vector<2x256xf32> to vector<2x1x256xf32>
    %11 = tpu.reciprocal %10 {approx = true} : vector<2x1x256xf32> -> vector<2x1x256xf32>
    %12 = arith.mulf %10, %11 : vector<2x1x256xf32>
    %cst_4 = arith.constant 2.000000e+00 : f32
    %13 = vector.broadcast %cst_4 : f32 to vector<2x1x256xf32>
    %14 = arith.subf %13, %12 : vector<2x1x256xf32>
    %15 = arith.mulf %11, %14 : vector<2x1x256xf32>
    %16 = vector.broadcast %15 : vector<2x1x256xf32> to vector<2x4x256xf32>
    %17 = arith.mulf %8, %16 : vector<2x4x256xf32>
    %c0_5 = arith.constant 0 : index
    %c0_6 = arith.constant 0 : index
    %18 = vector.load %arg3[%c0_5, %c0_6] : memref<2x256xi8, #tpu.memory_space<vmem>>, vector<2x256xi8>
    %19 = arith.extsi %18 : vector<2x256xi8> to vector<2x256xi32>
    %c-100_i32 = arith.constant -100 : i32
    %20 = vector.broadcast %c-100_i32 : i32 to vector<2x256xi32>
    %21 = arith.cmpi ne, %19, %20 : vector<2x256xi32>
    %22 = tpu.iota {dimensions = array<i32: 1>} : vector<1x4x1xi32>
    %23 = vector.shape_cast %19 : vector<2x256xi32> to vector<2x1x256xi32>
    %24 = vector.broadcast %23 : vector<2x1x256xi32> to vector<2x4x256xi32>
    %25 = vector.broadcast %22 : vector<1x4x1xi32> to vector<2x4x256xi32>
    %26 = arith.cmpi eq, %24, %25 : vector<2x4x256xi32>
    %27 = vector.shape_cast %21 : vector<2x256xi1> to vector<2x1x256xi1>
    %28 = vector.broadcast %27 : vector<2x1x256xi1> to vector<2x4x256xi1>
    %29 = arith.andi %26, %28 : vector<2x4x256xi1>
    %30 = vector.shape_cast %21 : vector<2x256xi1> to vector<2x1x256xi1>
    %cst_7 = arith.constant 0.000000e+00 : f32
    %31 = vector.shape_cast %30 : vector<2x1x256xi1> to vector<2x1x256xi1>
    %32 = vector.broadcast %31 : vector<2x1x256xi1> to vector<2x4x256xi1>
    %33 = vector.broadcast %cst_7 : f32 to vector<2x4x256xf32>
    %34 = arith.select %32, %17, %33 : vector<2x4x256xi1>, vector<2x4x256xf32>
    %cst_8 = arith.constant 0.000000e+00 : f32
    %35 = vector.broadcast %cst_8 : f32 to vector<2x4x256xf32>
    %36 = arith.select %29, %17, %35 : vector<2x4x256xi1>, vector<2x4x256xf32>
    %cst_9 = arith.constant dense<0.000000e+00> : vector<4x256xf32>
    %37 = vector.multi_reduction <add>, %36, %cst_9 [0] : vector<2x4x256xf32> to vector<4x256xf32>
    %cst_10 = arith.constant 1.000000e+00 : f32
    %cst_11 = arith.constant 0.000000e+00 : f32
    %38 = vector.broadcast %cst_10 : f32 to vector<2x4x256xf32>
    %39 = vector.broadcast %cst_11 : f32 to vector<2x4x256xf32>
    %40 = arith.select %29, %38, %39 : vector<2x4x256xi1>, vector<2x4x256xf32>
    %cst_12 = arith.constant dense<0.000000e+00> : vector<4x256xf32>
    %41 = vector.multi_reduction <add>, %40, %cst_12 [0] : vector<2x4x256xf32> to vector<4x256xf32>
    %42 = arith.mulf %34, %34 : vector<2x4x256xf32>
    %cst_13 = arith.constant dense<0.000000e+00> : vector<4x256xf32>
    %43 = vector.multi_reduction <add>, %42, %cst_13 [0] : vector<2x4x256xf32> to vector<4x256xf32>
    %c0_14 = arith.constant 0 : index
    %c0_15 = arith.constant 0 : index
    %44 = vector.load %arg5[%c0_14, %c0_15] : memref<12x256xf32, #tpu.memory_space<vmem>>, vector<4x256xf32>
    %45 = arith.addf %44, %37 : vector<4x256xf32>
    %c0_16 = arith.constant 0 : index
    %c0_17 = arith.constant 0 : index
    %46 = vector.load %arg5[%c0_16, %c0_17] : memref<12x256xf32, #tpu.memory_space<vmem>>, vector<4x256xf32>
    tpu.vector_store %arg5[%c0_16, %c0_17], %45 {strides = array<i32>} : memref<12x256xf32, #tpu.memory_space<vmem>>, vector<4x256xf32>,
    %c4 = arith.constant 4 : index
    %c0_18 = arith.constant 0 : index
    %47 = vector.load %arg5[%c4, %c0_18] : memref<12x256xf32, #tpu.memory_space<vmem>>, vector<4x256xf32>
    %48 = arith.addf %47, %41 : vector<4x256xf32>
    %c4_19 = arith.constant 4 : index
    %c0_20 = arith.constant 0 : index
    %49 = vector.load %arg5[%c4_19, %c0_20] : memref<12x256xf32, #tpu.memory_space<vmem>>, vector<4x256xf32>
    tpu.vector_store %arg5[%c4_19, %c0_20], %48 {strides = array<i32>} : memref<12x256xf32, #tpu.memory_space<vmem>>, vector<4x256xf32>,
    %c8 = arith.constant 8 : index
    %c0_21 = arith.constant 0 : index
    %50 = vector.load %arg5[%c8, %c0_21] : memref<12x256xf32, #tpu.memory_space<vmem>>, vector<4x256xf32>
    %51 = arith.addf %50, %43 : vector<4x256xf32>
    %c8_22 = arith.constant 8 : index
    %c0_23 = arith.constant 0 : index
    %52 = vector.load %arg5[%c8_22, %c0_23] : memref<12x256xf32, #tpu.memory_space<vmem>>, vector<4x256xf32>
    tpu.vector_store %arg5[%c8_22, %c0_23], %51 {strides = array<i32>} : memref<12x256xf32, #tpu.memory_space<vmem>>, vector<4x256xf32>,
    %c0_i32_24 = arith.constant 0 : i32
    %53 = arith.cmpi eq, %arg1, %c0_i32_24 : i32
    %54 = arith.extui %53 : i1 to i32
    %c0_i32_25 = arith.constant 0 : i32
    %55 = arith.cmpi ne, %54, %c0_i32_25 : i32
    scf.if %55 {
      %c0_26 = arith.constant 0 : index
      %c0_27 = arith.constant 0 : index
      %56 = vector.load %arg5[%c0_26, %c0_27] : memref<12x256xf32, #tpu.memory_space<vmem>>, vector<12x256xf32>
      %cst_28 = arith.constant dense<0.000000e+00> : vector<12xf32>
      %57 = vector.multi_reduction <add>, %56, %cst_28 [1] : vector<12x256xf32> to vector<12xf32>
      %58 = vector.shape_cast %57 : vector<12xf32> to vector<12x1xf32>
      %59 = vector.shape_cast %58 : vector<12x1xf32> to vector<1x12x1xf32>
      %c0_29 = arith.constant 0 : index
      %c0_30 = arith.constant 0 : index
      %c0_31 = arith.constant 0 : index
      %60 = vector.load %arg4[%c0_29, %c0_30, %c0_31] : memref<1x12x1xf32, #tpu.memory_space<vmem>>, vector<1x12x1xf32>
      tpu.vector_store %arg4[%c0_29, %c0_30, %c0_31], %59 {strides = array<i32>} : memref<1x12x1xf32, #tpu.memory_space<vmem>>, vector<1x12x1xf32>,
    } else {
    }
    return
  }
  func.func @transform_0(%arg0: i32, %arg1: i32) -> (i32, i32, i32) {
    %c1_i32 = arith.constant 1 : i32
    %0 = arith.muli %arg0, %c1_i32 : i32
    %1 = arith.addi %0, %arg1 : i32
    %c0_i32 = arith.constant 0 : i32
    %2 = arith.minsi %1, %c0_i32 : i32
    %c0_i32_0 = arith.constant 0 : i32
    %c0_i32_1 = arith.constant 0 : i32
    %c0_i32_2 = arith.constant 0 : i32
    return %c0_i32_0, %c0_i32_1, %2 : i32, i32, i32
  }
  func.func @transform_1(%arg0: i32, %arg1: i32) -> (i32, i32) {
    %c1_i32 = arith.constant 1 : i32
    %0 = arith.muli %arg0, %c1_i32 : i32
    %1 = arith.addi %0, %arg1 : i32
    %c0_i32 = arith.constant 0 : i32
    %2 = arith.minsi %1, %c0_i32 : i32
    %c0_i32_0 = arith.constant 0 : i32
    %c0_i32_1 = arith.constant 0 : i32
    return %c0_i32_0, %2 : i32, i32
  }
  func.func @transform_2(%arg0: i32, %arg1: i32) -> (i32, i32, i32) {
    %c0_i32 = arith.constant 0 : i32
    %c0_i32_0 = arith.constant 0 : i32
    %c0_i32_1 = arith.constant 0 : i32
    return %arg0, %c0_i32, %c0_i32_0 : i32, i32, i32
  }
}

</mosaic_0001>

<llo_original>
// kernel: tpu_custom_call.1
$region0: #{tpu_custom_call.1}
  #allocation0 [shape = 'u32[]', space=smem, size = 0x4, offset = 0x4, fixed_abs, tag = 'smem constant byte address 0x4 - core index']
  #allocation1 [shape = 'u32[144,128]{1,0:T(1,128)}', space=vmem, size = 0x12000, scoped, tag = 'internal scratch']
  #allocation2 [shape = 'f32[12,256]{1,0:T(8,128)}', space=vmem, size = 0x4000, scoped, tag = 'scratch operand']
  %s0 = inlined_call_operand.hbm [shape: f32[2,4,256], index: 0, kind: input, shape index: {}]
  %s1 = inlined_call_operand.vmem [shape: s8[2,256], index: 1, kind: input, shape index: {}]
  %s2 = inlined_call_operand.vmem [shape: f32[1,12,1], index: 2, kind: output, shape index: {}]
  %s3 = sld [smem:[#allocation0]]
  $region30: #{tpu_custom_call.1} parent=0
    _
  %s5 = ssub.s32 1, %s3
  %s6 = scalar_select 0, %s5, %s3
  $region1: #{tpu_custom_call.1} parent=0
    #allocation3 [shape = 'u8[8192]{0}', space=vmem, size = 0x2000, scoped, tag = 'input window, operand 0, single buffered']
    #allocation4 [shape = 's32[1]{0}', space=sflag, size = 0x4, scoped, tag = 'scoped memory for tpu_custom_call.1']
    %7 = vsyncpa [#allocation4], 0
    // Predicated region
    $region2: #{tpu_custom_call.1} parent=1 // pred_check
      _
    $region3: #{tpu_custom_call.1} parent=1 // pred_check_branch
      %9 = sbr.rel (0) target = $region5
    $region4: #{tpu_custom_call.1} parent=1 // pred_region
      %s10 = sadd.s32 0, 0
      %p11 = scmp.lt.s32.totalorder %s10, 0
      %s12 = scalar_select %p11, %s10, 0
      %s13 = smul.u32 2, %s12
      %s15 = ssub.s32 256, 256
      %16 = vsyncadd [#allocation4], %s15
      %s17 = smul.addr %s13, 64
      %s18 = scalar_lea.hbm %s0, %s17
      %s19 = sshll.u32 [#allocation3], 4
      %s20 = int_to_ptr.vmem [resolvable:$true] %s19
      %25 = dma.hbm_to_vmem [thread:$0]  %s18, 256, %s20, [#allocation4], 128, 128, 8
    $region5: #{tpu_custom_call.1} parent=1 // pred_fallthru
      _
    // Predicated region
    $region6: #{tpu_custom_call.1} parent=1 // pred_check
      _
    $region7: #{tpu_custom_call.1} parent=1 // pred_check_branch
      %27 = sbr.rel (0) target = $region9
    $region8: #{tpu_custom_call.1} parent=1 // pred_region
      %s28 = sadd.s32 0, 0
      %p29 = scmp.lt.s32.totalorder %s28, 0
      %s30 = scalar_select %p29, %s28, 0
      %s31 = smul.u32 2, %s30
      %p32 = scmp.lt.s32.totalorder %s31, 1
      %s33 = scalar_select %p32, %s31, 1
      %s34 = scalar_lea.vmem %s1, %s33
      %s35 = sadd.s32 0, 0
      %p36 = scmp.lt.s32.totalorder %s35, 0
      %s37 = scalar_select %p36, %s35, 0
      %s38 = smul.u32 2, %s37
    $region9: #{tpu_custom_call.1} parent=1 // pred_fallthru
      _
    // Predicated region
    $region10: #{tpu_custom_call.1} parent=1 // pred_check
      _
    $region11: #{tpu_custom_call.1} parent=1 // pred_check_branch
      %40 = sbr.rel (0) target = $region13
    $region12: #{tpu_custom_call.1} parent=1 // pred_region
      %41 = dma.done [#allocation4], 256
    $region13: #{tpu_custom_call.1} parent=1 // pred_fallthru
      _
    %s42 = sadd.s32 0, 0
    %p43 = scmp.lt.s32.totalorder %s42, 0
    %s44 = scalar_select %p43, %s42, 0
    %s45 = smul.u32 2, %s44
    %p46 = scmp.lt.s32.totalorder %s45, 1
    %s47 = scalar_select %p46, %s45, 1
    %s48 = scalar_lea.vmem %s1, %s47
    %s49 = sadd.s32 0, 0
    %p50 = scmp.lt.s32.totalorder %s49, 0
    %s51 = scalar_select %p50, %s49, 0
    %s52 = smul.u32 2, %s51
    %s53 = sadd.s32 0, 0
    %p54 = scmp.lt.s32.totalorder %s53, 0
    %s55 = scalar_select %p54, %s53, 0
    %s56 = smul.u32 2, %s55
    %p57 = scmp.lt.s32.totalorder %s56, 1
    %s58 = scalar_select %p57, %s56, 1
    %s59 = scalar_lea.vmem %s1, %s58
    %s60 = sadd.s32 0, 0
    %p61 = scmp.lt.s32.totalorder %s60, 0
    %s62 = scalar_select %p61, %s60, 0
    %s63 = smul.u32 2, %s62
    %p64 = scmp.eq.s32.totalorder 0, 0
    // Predicated region
    $region14: #{tpu_custom_call.1} parent=1 // pred_check
      %p65 = pneg %p64
    $region15: #{tpu_custom_call.1} parent=1 // pred_check_branch
      %67 = sbr.rel (%p65) target = $region17
    $region16: #{tpu_custom_call.1} parent=1 // pred_region
      %68 = vst [vmem:[#allocation2] sm:$0xff] 0.0
      %69 = vst [vmem:[#allocation2 + $0x8] sm:$0xff] 0.0
      %70 = vst [vmem:[#allocation2 + $0x10] sm:$0xf] 0.0
      %71 = vst [vmem:[#allocation2 + $0x18] sm:$0xf] 0.0
    $region17: #{tpu_custom_call.1} parent=1 // pred_fallthru
      _
    %v72 = vld [vmem:[#allocation3] sm:$0xff]
    %v73 = vld [vmem:[#allocation3 + $0x8] sm:$0xff]
    %v76 = vcombine.high %v72, %v72
    %v77 = vcombine.high %v73, %v73
    %vm80 = vcmask 1043456
    %v81 = vsel %vm80, %v72, -inf
    %v82 = vrot.slane %v81, 4
    %v83 = vmax.f32 %v81, %v82
    %v84 = vrot.slane %v83, 2
    %v85 = vmax.f32 %v83, %v84
    %v86 = vrot.slane %v85, 1
    %v87 = vmax.f32 %v85, %v86
    %v88 = vsel %vm80, %v76, -inf
    %v89 = vrot.slane %v88, 4
    %v90 = vmax.f32 %v88, %v89
    %v91 = vrot.slane %v90, 2
    %v92 = vmax.f32 %v90, %v91
    %v93 = vrot.slane %v92, 1
    %v94 = vmax.f32 %v92, %v93
    %v95 = vsel %vm80, %v73, -inf
    %v96 = vrot.slane %v95, 4
    %v97 = vmax.f32 %v95, %v96
    %v98 = vrot.slane %v97, 2
    %v99 = vmax.f32 %v97, %v98
    %v100 = vrot.slane %v99, 1
    %v101 = vmax.f32 %v99, %v100
    %v102 = vsel %vm80, %v77, -inf
    %v103 = vrot.slane %v102, 4
    %v104 = vmax.f32 %v102, %v103
    %v105 = vrot.slane %v104, 2
    %v106 = vmax.f32 %v104, %v105
    %v107 = vrot.slane %v106, 1
    %v108 = vmax.f32 %v106, %v107
    %v113 = vcombine.low %v87, %v94
    %v114 = vcombine.low %v101, %v108
    %v117 = vsub.f32 %v72, %v113
    %v118 = vsub.f32 %v73, %v114
    %v119 = vmul.f32 %v117, 1.442695
    %v120 = vpow.pop %v119
    %v121 = vmul.f32 %v118, 1.442695
    %v122 = vpow.pop %v121
    %v125 = vcombine.high %v120, %v120
    %v126 = vcombine.high %v122, %v122
    %v129 = vsel %vm80, %v120, 0.0
    %v130 = vrot.slane %v129, 4
    %v131 = vadd.f32 %v129, %v130
    %v132 = vrot.slane %v131, 2
    %v133 = vadd.f32 %v131, %v132
    %v134 = vrot.slane %v133, 1
    %v135 = vadd.f32 %v133, %v134
    %v136 = vsel %vm80, %v125, 0.0
    %v137 = vrot.slane %v136, 4
    %v138 = vadd.f32 %v136, %v137
    %v139 = vrot.slane %v138, 2
    %v140 = vadd.f32 %v138, %v139
    %v141 = vrot.slane %v140, 1
    %v142 = vadd.f32 %v140, %v141
    %v143 = vsel %vm80, %v122, 0.0
    %v144 = vrot.slane %v143, 4
    %v145 = vadd.f32 %v143, %v144
    %v146 = vrot.slane %v145, 2
    %v147 = vadd.f32 %v145, %v146
    %v148 = vrot.slane %v147, 1
    %v149 = vadd.f32 %v147, %v148
    %v150 = vsel %vm80, %v126, 0.0
    %v151 = vrot.slane %v150, 4
    %v152 = vadd.f32 %v150, %v151
    %v153 = vrot.slane %v152, 2
    %v154 = vadd.f32 %v152, %v153
    %v155 = vrot.slane %v154, 1
    %v156 = vadd.f32 %v154, %v155
    %v157 = vrcp.pop %v135
    %v158 = vrcp.pop %v142
    %v159 = vrcp.pop %v149
    %v160 = vrcp.pop %v156
    %v161 = vmul.f32 %v135, %v157
    %v162 = vmul.f32 %v142, %v158
    %v163 = vmul.f32 %v149, %v159
    %v164 = vmul.f32 %v156, %v160
    %v165 = vsub.f32 2.0, %v161
    %v166 = vsub.f32 2.0, %v162
    %v167 = vsub.f32 2.0, %v163
    %v168 = vsub.f32 2.0, %v164
    %v169 = vmul.f32 %v157, %v165
    %v170 = vmul.f32 %v158, %v166
    %v171 = vmul.f32 %v159, %v167
    %v172 = vmul.f32 %v160, %v168
    %v177 = vcombine.low %v169, %v170
    %v178 = vcombine.low %v171, %v172
    %v181 = vmul.f32 %v120, %v177
    %v182 = vmul.f32 %v122, %v178
    %v183 = vld [vmem:[%s59] sm:$0x3]
    %v184 = vunpack.c.0.s8 %v183
    %vm185 = vcmp.ne.s32.totalorder %v184, 4294967196
    %v186 = vlaneseq
    %v187 = vshrl.u32 %v186, 7
    %v189 = vunpack.c.l.s4 1966171168
    %v190 = vunpack.c.0.s8 %v189
    %v191 = vlaneseq
    %v192 = vshrl.u32 %v191, 7
    %v193 = vsub.s32 %v190, %v192
    %v194 = vrot.slane %v184, %v193
    %v195 = vcombine.high %v194, %v194
    %v197 = vunpack.c.l.s4 1966171168
    %v198 = vunpack.c.0.s8 %v197
    %v199 = vlaneseq
    %v200 = vshrl.u32 %v199, 7
    %v201 = vsub.s32 %v198, %v200
    %v202 = vrot.slane %v194, %v201
    %v204 = vunpack.c.l.s4 1966171168
    %v205 = vunpack.c.0.s8 %v204
    %v206 = vlaneseq
    %v207 = vshrl.u32 %v206, 7
    %v208 = vsub.s32 %v205, %v207
    %v209 = vrot.slane %v195, %v208
    %v210 = vlaneseq
    %v211 = vshrl.u32 %v210, 7
    %v212 = vsub.s32 0, %v211
    %v213 = vrot.slane %v202, %v212
    %v214 = vlaneseq
    %v215 = vshrl.u32 %v214, 7
    %v216 = vsub.s32 1, %v215
    %v217 = vrot.slane %v202, %v216
    %v218 = vlaneseq
    %v219 = vshrl.u32 %v218, 7
    %v220 = vsub.s32 0, %v219
    %v221 = vrot.slane %v209, %v220
    %v222 = vlaneseq
    %v223 = vshrl.u32 %v222, 7
    %v224 = vsub.s32 1, %v223
    %v225 = vrot.slane %v209, %v224
    %vm226 = vcmp.eq.s32.totalorder %v213, %v187
    %vm227 = vcmp.eq.s32.totalorder %v217, %v187
    %vm228 = vcmp.eq.s32.totalorder %v221, %v187
    %vm229 = vcmp.eq.s32.totalorder %v225, %v187
    %v230 = vsel %vm185, 1, 0
    %v232 = vunpack.c.l.s4 1966171168
    %v233 = vunpack.c.0.s8 %v232
    %v234 = vlaneseq
    %v235 = vshrl.u32 %v234, 7
    %v236 = vsub.s32 %v233, %v235
    %v237 = vrot.slane %v230, %v236
    %v238 = vcombine.high %v237, %v237
    %v240 = vunpack.c.l.s4 1966171168
    %v241 = vunpack.c.0.s8 %v240
    %v242 = vlaneseq
    %v243 = vshrl.u32 %v242, 7
    %v244 = vsub.s32 %v241, %v243
    %v245 = vrot.slane %v237, %v244
    %v247 = vunpack.c.l.s4 1966171168
    %v248 = vunpack.c.0.s8 %v247
    %v249 = vlaneseq
    %v250 = vshrl.u32 %v249, 7
    %v251 = vsub.s32 %v248, %v250
    %v252 = vrot.slane %v238, %v251
    %vm253 = vcmp.ne.s32.totalorder %v245, 0
    %vm254 = vcmp.ne.s32.totalorder %v252, 0
    %v255 = vsel %vm253, 1, 0
    %v256 = vsel %vm254, 1, 0
    %v257 = vlaneseq
    %v258 = vshrl.u32 %v257, 7
    %v259 = vsub.s32 0, %v258
    %v260 = vrot.slane %v255, %v259
    %v261 = vlaneseq
    %v262 = vshrl.u32 %v261, 7
    %v263 = vsub.s32 1, %v262
    %v264 = vrot.slane %v255, %v263
    %v265 = vlaneseq
    %v266 = vshrl.u32 %v265, 7
    %v267 = vsub.s32 0, %v266
    %v268 = vrot.slane %v256, %v267
    %v269 = vlaneseq
    %v270 = vshrl.u32 %v269, 7
    %v271 = vsub.s32 1, %v270
    %v272 = vrot.slane %v256, %v271
    %vm273 = vcmp.eq.s32.totalorder %v260, 1
    %vm274 = vcmp.eq.s32.totalorder %v264, 1
    %vm275 = vcmp.eq.s32.totalorder %v268, 1
    %vm276 = vcmp.eq.s32.totalorder %v272, 1
    %vm277 = vmand %vm226, %vm273
    %vm278 = vmand %vm227, %vm274
    %vm279 = vmand %vm228, %vm275
    %vm280 = vmand %vm229, %vm276
    %v283 = vcombine.high %v181, %v181
    %v284 = vcombine.high %v182, %v182
    %v287 = vsel %vm273, %v181, 0.0
    %v288 = vsel %vm274, %v283, 0.0
    %v289 = vsel %vm275, %v182, 0.0
    %v290 = vsel %vm276, %v284, 0.0
    %v291 = vsel %vm277, %v181, 0.0
    %v292 = vsel %vm278, %v283, 0.0
    %v293 = vsel %vm279, %v182, 0.0
    %v294 = vsel %vm280, %v284, 0.0
    %v295 = vsel %vm80, %v291, 0.0
    %v296 = vsel %vm80, %v293, 0.0
    %v297 = vadd.f32 %v295, %v296
    %v298 = vsel %vm80, %v292, 0.0
    %v299 = vsel %vm80, %v294, 0.0
    %v300 = vadd.f32 %v298, %v299
    %v301 = vsel %vm277, 1.0, 0.0
    %v302 = vsel %vm278, 1.0, 0.0
    %v303 = vsel %vm279, 1.0, 0.0
    %v304 = vsel %vm280, 1.0, 0.0
    %v305 = vsel %vm80, %v301, 0.0
    %v306 = vsel %vm80, %v303, 0.0
    %v307 = vadd.f32 %v305, %v306
    %v308 = vsel %vm80, %v302, 0.0
    %v309 = vsel %vm80, %v304, 0.0
    %v310 = vadd.f32 %v308, %v309
    %v311 = vmul.f32 %v287, %v287
    %v312 = vmul.f32 %v288, %v288
    %v313 = vmul.f32 %v289, %v289
    %v314 = vmul.f32 %v290, %v290
    %v315 = vsel %vm80, %v311, 0.0
    %v316 = vsel %vm80, %v313, 0.0
    %v317 = vadd.f32 %v315, %v316
    %v318 = vsel %vm80, %v312, 0.0
    %v319 = vsel %vm80, %v314, 0.0
    %v320 = vadd.f32 %v318, %v319
    %v321 = vld [vmem:[#allocation2] sm:$0xf]
    %v322 = vld [vmem:[#allocation2 + $0x8] sm:$0xf]
    %v323 = vadd.f32 %v321, %v297
    %v324 = vadd.f32 %v322, %v300
    %325 = vst [vmem:[#allocation2] sm:$0xf] %v323
    %326 = vst [vmem:[#allocation2 + $0x8] sm:$0xf] %v324
    %v327 = vld [vmem:[#allocation2] sm:$0xf0]
    %v328 = vld [vmem:[#allocation2 + $0x8] sm:$0xf0]
    %v331 = vrot.slane %v307, 4
    %v332 = vrot.slane %v310, 4
    %v335 = vadd.f32 %v327, %v331
    %v336 = vadd.f32 %v328, %v332
    %337 = vst [vmem:[#allocation2] sm:$0xf0] %v335
    %338 = vst [vmem:[#allocation2 + $0x8] sm:$0xf0] %v336
    %v339 = vld [vmem:[#allocation2 + $0x10] sm:$0xf]
    %v340 = vld [vmem:[#allocation2 + $0x18] sm:$0xf]
    %v341 = vadd.f32 %v339, %v317
    %v342 = vadd.f32 %v340, %v320
    %343 = vst [vmem:[#allocation2 + $0x10] sm:$0xf] %v341
    %344 = vst [vmem:[#allocation2 + $0x18] sm:$0xf] %v342
    // Predicated region
    $region18: #{tpu_custom_call.1} parent=1 // pred_check
      %p345 = pneg %p64
    $region19: #{tpu_custom_call.1} parent=1 // pred_check_branch
      %347 = sbr.rel (%p345) target = $region21
    $region20: #{tpu_custom_call.1} parent=1 // pred_region
      %v348 = vld [vmem:[#allocation2] sm:$0xff]
      %v349 = vld [vmem:[#allocation2 + $0x8] sm:$0xff]
      %v350 = vld [vmem:[#allocation2 + $0x10] sm:$0xf]
      %v351 = vld [vmem:[#allocation2 + $0x18] sm:$0xf]
      %v352 = vadd.f32 %v348, %v349
      %353 = vadd.xlane.f32.xlu0 %v352
      %v354 = vpop.xlane.xlu0 %353
      %v355 = vsel %vm80, %v350, 0.0
      %v356 = vsel %vm80, %v351, 0.0
      %v357 = vadd.f32 %v355, %v356
      %358 = vadd.xlane.f32.xlu0 %v357
      %v359 = vpop.xlane.xlu0 %358
      %vm360 = vcmask 7168
      %361 = vst.msk [vmem:[%s2] sm:$0xff] %vm360, %v354
      %vm362 = vcmask 3072
      %363 = vst.msk [vmem:[%s2 + $0x8] sm:$0xf] %vm362, %v359
    $region21: #{tpu_custom_call.1} parent=1 // pred_fallthru
      _
    // Predicated region
    $region22: #{tpu_custom_call.1} parent=1 // pred_check
      _
    $region23: #{tpu_custom_call.1} parent=1 // pred_check_branch
      %365 = sbr.rel (0) target = $region25
    $region24: #{tpu_custom_call.1} parent=1 // pred_region
      _
    $region25: #{tpu_custom_call.1} parent=1 // pred_fallthru
      _
    // Predicated region
    $region26: #{tpu_custom_call.1} parent=1 // pred_check
      _
    $region27: #{tpu_custom_call.1} parent=1 // pred_check_branch
      %367 = sbr.rel (0) target = $region29
    $region28: #{tpu_custom_call.1} parent=1 // pred_region
      _
    $region29: #{tpu_custom_call.1} parent=1 // pred_fallthru
      _
    %368 = vsyncpa [#allocation4], 1

</llo_original>
